<compile_context>
chip_gen: v7x
topology: tpu7x:2x2x1
jax: 0.10.0
libtpu: 0.0.40
codegen_flags: <defaults>
</compile_context>

<pallas_src>
import jax
import jax.numpy as jnp
from jax.experimental import pallas as pl
from jax.experimental.pallas import tpu as pltpu


def _make_attention_kernel(channels_last: bool, hw: int):
    """Kernel over one (TB, C, HW) or (TB, HW, C) slab: pool -> gate MLP -> scale."""
    inv_hw = 1.0 / float(hw)
    pool_axis = 1 if channels_last else 2

    def kernel(x_ref,
               w1_ref, b1_ref,
               w2i_ref, b2i_ref,
               w2c_ref, b2c_ref,
               w2o_ref, b2o_ref,
               o_ref):
        x = x_ref[...]                                        # lane-dense last dim

        # --- Global average pool, f32 accumulation (cast fused into the reduce) ---
        seq = jnp.sum(x.astype(jnp.float32), axis=pool_axis) * inv_hw      # (TB, C)

        # --- ih small_cell: Linear(C, C//4) -> ReLU (hh path pre-folded into biases) ---
        h1 = jnp.dot(seq, w1_ref[...], preferred_element_type=jnp.float32) + b1_ref[...]
        h1 = jnp.maximum(h1, 0.0)                             # (TB, C//4)

        # --- per-gate Linear(C//4, C); forget gate dropped (cx == 0) ---
        i_g = jax.nn.sigmoid(
            jnp.dot(h1, w2i_ref[...], preferred_element_type=jnp.float32) + b2i_ref[...])
        c_g = jnp.tanh(
            jnp.dot(h1, w2c_ref[...], preferred_element_type=jnp.float32) + b2c_ref[...])
        o_g = jax.nn.sigmoid(
            jnp.dot(h1, w2o_ref[...], preferred_element_type=jnp.float32) + b2o_ref[...])

        # cx == 0  ->  ncx = sigmoid(i) * tanh(c)
        nhx = o_g * jax.nn.sigmoid(i_g * c_g)                 # (TB, C)

        # --- x*h + x == x*(1+h): fused scale + residual + ReLU in the input dtype ---
        scale = (1.0 + nhx).astype(x.dtype)                   # (TB, C)
        if channels_last:
            y = x * scale[:, None, :]
        else:
            y = x * scale[:, :, None]
        o_ref[...] = jnp.maximum(y, 0.0).astype(o_ref.dtype)

    return kernel


def attention_forward(x, params):
    B, C, H, W = x.shape
    assert C % 4 == 0, "channel must be divisible by 4 (Linear(C, C//4) + 4-way gate chunk)"
    HW = H * W
    c4 = C // 4

    # hh small_cell with hx == 0 reduces to a constant (1, 4C) vector; fold into ih bias.
    gates_hh = jnp.maximum(params["b1h"], 0.0) @ params["w2h"] + params["b2h"]   # (1, 4C)
    b2 = params["b2i"] + gates_hh
    w2 = params["w2i"]                                       # (C//4, 4C), gate order [i,f,c,o]

    # Per-gate slices (forget gate dropped — it multiplies cx == 0).
    w2_i, b2_i = w2[:, 0 * C:1 * C], b2[:, 0 * C:1 * C]
    w2_c, b2_c = w2[:, 2 * C:3 * C], b2[:, 2 * C:3 * C]
    w2_o, b2_o = w2[:, 3 * C:4 * C], b2[:, 3 * C:4 * C]

    # --- Lane-dense layout choice: put a 128-multiple (or the larger) dim on lanes ---
    if HW % 128 == 0:
        channels_last = False
    elif C % 128 == 0:
        channels_last = True
    else:
        channels_last = C >= HW

    if channels_last:
        x3 = jnp.transpose(x.reshape(B, C, HW), (0, 2, 1))   # (B, HW, C), lanes = C
        blk = lambda tb: (tb, HW, C)
    else:
        x3 = x.reshape(B, C, HW)                             # (B, C, HW), lanes = HW
        blk = lambda tb: (tb, C, HW)

    itemsize = jnp.dtype(x.dtype).itemsize
    slab_bytes = C * HW * itemsize                           # one batch row in VMEM
    weight_bytes = 4 * (C * c4 + c4 + 3 * (c4 * C + C))      # f32 weights + biases

    # --- TB rows per grid step, bounded by a v7x-safe VMEM budget ---
    budget = 40 * 1024 * 1024
    tb_cap = max(1, int((budget - 2 * weight_bytes) // (4 * slab_bytes)))
    TB = max(1, min(8, B, tb_cap))
    if B // TB < 2 and B > 1:                                # keep >= 2 steps for v7x's 2 TCs
        TB = max(1, B // 2)
    while B % TB:                                            # keep the grid even
        TB -= 1

    # 2x double-buffered input slab + 2x output slab + double-buffered resident weights.
    vmem_needed = 4 * TB * slab_bytes + 2 * weight_bytes
    vmem_limit = int(min(max(vmem_needed + (8 << 20), 32 << 20), 48 << 20))

    cost = pl.CostEstimate(
        flops=4 * B * C * HW            # pool add + scale + residual + relu
        + 2 * B * C * c4                # first Linear
        + 3 * 2 * B * c4 * C,           # three gate Linears (forget gate dropped)
        transcendentals=4 * B * C,      # sigmoid(i), tanh(c), sigmoid(o), sigmoid(ncx)
        bytes_accessed=2 * B * C * HW * itemsize + weight_bytes,
    )

    def full(shape):
        # Constant index_map: weight tile stays resident, never re-DMA'd across steps.
        return pl.BlockSpec(shape, lambda b: (0,) * len(shape))

    kernel = _make_attention_kernel(channels_last, HW)

    out3 = pl.pallas_call(
        kernel,
        out_shape=jax.ShapeDtypeStruct(x3.shape, x.dtype),
        grid=(B // TB,),
        in_specs=[
            pl.BlockSpec(blk(TB), lambda b: (b, 0, 0)),      # x slab (pipelined over batch)
            full((C, c4)), full((1, c4)),                    # first Linear
            full((c4, C)), full((1, C)),                     # i-gate Linear
            full((c4, C)), full((1, C)),                     # c-gate Linear
            full((c4, C)), full((1, C)),                     # o-gate Linear
        ],
        out_specs=pl.BlockSpec(blk(TB), lambda b: (b, 0, 0)),
        compiler_params=pltpu.CompilerParams(
            dimension_semantics=("parallel",),               # 2 TCs on v7x; free elsewhere
            vmem_limit_bytes=vmem_limit,
        ),
        cost_estimate=cost,
    )(x3, params["w1i"], params["b1i"],
      w2_i, b2_i, w2_c, b2_c, w2_o, b2_o)

    if channels_last:
        return jnp.transpose(out3, (0, 2, 1)).reshape(B, C, H, W)
    return out3.reshape(B, C, H, W)


attention_forward_jit = jax.jit(attention_forward)


def init_params(key, channel):
    c4 = channel // 4
    ks = jax.random.split(key, 8)
    scale = 0.1
    return {
        # ih small_cell: Linear(C, C//4) -> ReLU -> Linear(C//4, 4C)
        "w1i": scale * jax.random.normal(ks[0], (channel, c4), jnp.float32),
        "b1i": scale * jax.random.normal(ks[1], (1, c4), jnp.float32),
        "w2i": scale * jax.random.normal(ks[2], (c4, 4 * channel), jnp.float32),
        "b2i": scale * jax.random.normal(ks[3], (1, 4 * channel), jnp.float32),
        # hh small_cell: Linear(C, C//4) -> ReLU -> Linear(C//4, 4C)
        "w1h": scale * jax.random.normal(ks[4], (channel, c4), jnp.float32),
        "b1h": scale * jax.random.normal(ks[5], (1, c4), jnp.float32),
        "w2h": scale * jax.random.normal(ks[6], (c4, 4 * channel), jnp.float32),
        "b2h": scale * jax.random.normal(ks[7], (1, 4 * channel), jnp.float32),
    }


def attention_reference(x, p):
    """Pure-JAX reference mirroring the PyTorch forward pass exactly."""
    B, C, H, W = x.shape
    seq = jnp.mean(x, axis=(2, 3))                           # (B, C)
    gates_ih = jnp.maximum(seq @ p["w1i"] + p["b1i"], 0.0) @ p["w2i"] + p["b2i"]
    hx = jnp.zeros_like(seq)
    gates_hh = jnp.maximum(hx @ p["w1h"] + p["b1h"], 0.0) @ p["w2h"] + p["b2h"]
    gates = gates_ih + gates_hh
    i_g = jax.nn.sigmoid(gates[:, 0 * C:1 * C])
    f_g = jax.nn.sigmoid(gates[:, 1 * C:2 * C])
    c_g = jnp.tanh(gates[:, 2 * C:3 * C])
    o_g = jax.nn.sigmoid(gates[:, 3 * C:4 * C])
    ncx = f_g * 0.0 + i_g * c_g
    nhx = o_g * jax.nn.sigmoid(ncx)
    y = x * nhx[:, :, None, None] + x
    return jnp.maximum(y, 0.0)


def _check(out, ref, tag):
    # Tolerance covers MXU precision-mode differences (bf16-pass vs full f32) between
    # the in-kernel dots and the XLA reference dots; structural bugs give O(1e-1) errors.
    err = float(jnp.max(jnp.abs(out - ref)))
    assert out.shape == ref.shape, f"{tag}: shape mismatch {out.shape} vs {ref.shape}"
    assert err < 2e-3, f"{tag}: mismatch vs reference, max abs err = {err}"


if __name__ == "__main__":
    key = jax.random.PRNGKey(0)

    # Case 1: HW = 256 is a 128-multiple -> channels-first lanes, TB = 2 batch rows/step.
    B, C, H, W = 4, 16, 16, 16
    kx, kp, key = jax.random.split(key, 3)
    x = jax.random.normal(kx, (B, C, H, W), jnp.float32)
    params = init_params(kp, C)
    out = jax.block_until_ready(attention_forward_jit(x, params))
    _check(out, attention_reference(x, params), "channels_first")

    # Case 2: HW = 49 (not a 128-multiple), C = 128 -> channels-last lane-dense layout.
    B2, C2, H2, W2 = 2, 128, 7, 7
    kx2, kp2 = jax.random.split(key)
    x2 = jax.random.normal(kx2, (B2, C2, H2, W2), jnp.float32)
    params2 = init_params(kp2, C2)
    out2 = jax.block_until_ready(attention_forward_jit(x2, params2))
    _check(out2, attention_reference(x2, params2), "channels_last")

    print("KERNEL_OK")
</pallas_src>

<mosaic_0001>
module attributes {stable_mosaic.version = 11 : i64} {
  func.func @kernel(%arg0: i32, %arg1: memref<2x16x256xf32, #tpu.memory_space<vmem>>, %arg2: memref<16x4xf32, #tpu.memory_space<vmem>>, %arg3: memref<1x4xf32, #tpu.memory_space<vmem>>, %arg4: memref<4x16xf32, #tpu.memory_space<vmem>>, %arg5: memref<1x16xf32, #tpu.memory_space<vmem>>, %arg6: memref<4x16xf32, #tpu.memory_space<vmem>>, %arg7: memref<1x16xf32, #tpu.memory_space<vmem>>, %arg8: memref<4x16xf32, #tpu.memory_space<vmem>>, %arg9: memref<1x16xf32, #tpu.memory_space<vmem>>, %arg10: memref<2x16x256xf32, #tpu.memory_space<vmem>>) attributes {dimension_semantics = [#tpu.dimension_semantics<parallel>], iteration_bounds = array<i64: 2>, scalar_prefetch = 0 : i64, scratch_operands = 0 : i64, tpu.core_type = #tpu.core_type<tc>, window_params = [{transform_indices = @transform_0, window_bounds = array<i64: 2, 16, 256>}, {pipeline_mode = #tpu.pipeline_mode<synchronous>, transform_indices = @transform_1, window_bounds = array<i64: 16, 4>}, {pipeline_mode = #tpu.pipeline_mode<synchronous>, transform_indices = @transform_2, window_bounds = array<i64: 1, 4>}, {pipeline_mode = #tpu.pipeline_mode<synchronous>, transform_indices = @transform_3, window_bounds = array<i64: 4, 16>}, {pipeline_mode = #tpu.pipeline_mode<synchronous>, transform_indices = @transform_4, window_bounds = array<i64: 1, 16>}, {pipeline_mode = #tpu.pipeline_mode<synchronous>, transform_indices = @transform_5, window_bounds = array<i64: 4, 16>}, {pipeline_mode = #tpu.pipeline_mode<synchronous>, transform_indices = @transform_6, window_bounds = array<i64: 1, 16>}, {pipeline_mode = #tpu.pipeline_mode<synchronous>, transform_indices = @transform_7, window_bounds = array<i64: 4, 16>}, {pipeline_mode = #tpu.pipeline_mode<synchronous>, transform_indices = @transform_8, window_bounds = array<i64: 1, 16>}, {transform_indices = @transform_9, window_bounds = array<i64: 2, 16, 256>}]} {
    %c0 = arith.constant 0 : index
    %c0_0 = arith.constant 0 : index
    %c0_1 = arith.constant 0 : index
    %0 = vector.load %arg1[%c0, %c0_0, %c0_1] : memref<2x16x256xf32, #tpu.memory_space<vmem>>, vector<2x16x256xf32>
    %cst = arith.constant dense<0.000000e+00> : vector<2x16xf32>
    %1 = vector.multi_reduction <add>, %0, %cst [2] : vector<2x16x256xf32> to vector<2x16xf32>
    %cst_2 = arith.constant 3.906250e-03 : f32
    %2 = vector.broadcast %cst_2 : f32 to vector<2x16xf32>
    %3 = arith.mulf %1, %2 : vector<2x16xf32>
    %c0_3 = arith.constant 0 : index
    %c0_4 = arith.constant 0 : index
    %4 = vector.load %arg2[%c0_3, %c0_4] : memref<16x4xf32, #tpu.memory_space<vmem>>, vector<16x4xf32>
    %cst_5 = arith.constant dense<0.000000e+00> : vector<2x4xf32>
    %5 = tpu.matmul %3, %4, %cst_5 {dimension_numbers = #tpu.dot_dimension_numbers<[1], [0], [0], [1], [0, 0, 1, 1], [], []>} : vector<2x16xf32>, vector<16x4xf32>, vector<2x4xf32> -> vector<2x4xf32>
    %c0_6 = arith.constant 0 : index
    %c0_7 = arith.constant 0 : index
    %6 = vector.load %arg3[%c0_6, %c0_7] : memref<1x4xf32, #tpu.memory_space<vmem>>, vector<1x4xf32>
    %7 = vector.broadcast %6 : vector<1x4xf32> to vector<2x4xf32>
    %8 = arith.addf %5, %7 : vector<2x4xf32>
    %cst_8 = arith.constant 0.000000e+00 : f32
    %9 = vector.broadcast %cst_8 : f32 to vector<2x4xf32>
    %10 = arith.maximumf %8, %9 : vector<2x4xf32>
    %c0_9 = arith.constant 0 : index
    %c0_10 = arith.constant 0 : index
    %11 = vector.load %arg4[%c0_9, %c0_10] : memref<4x16xf32, #tpu.memory_space<vmem>>, vector<4x16xf32>
    %cst_11 = arith.constant dense<0.000000e+00> : vector<2x16xf32>
    %12 = tpu.matmul %10, %11, %cst_11 {dimension_numbers = #tpu.dot_dimension_numbers<[1], [0], [0], [1], [0, 0, 1, 1], [], []>} : vector<2x4xf32>, vector<4x16xf32>, vector<2x16xf32> -> vector<2x16xf32>
    %c0_12 = arith.constant 0 : index
    %c0_13 = arith.constant 0 : index
    %13 = vector.load %arg5[%c0_12, %c0_13] : memref<1x16xf32, #tpu.memory_space<vmem>>, vector<1x16xf32>
    %14 = vector.broadcast %13 : vector<1x16xf32> to vector<2x16xf32>
    %15 = arith.addf %12, %14 : vector<2x16xf32>
    %16 = arith.negf %15 : vector<2x16xf32>
    %17 = math.exp %16 : vector<2x16xf32>
    %cst_14 = arith.constant 1.000000e+00 : f32
    %18 = vector.broadcast %cst_14 : f32 to vector<2x16xf32>
    %19 = arith.addf %18, %17 : vector<2x16xf32>
    %20 = arith.divf %18, %19 : vector<2x16xf32>
    %c0_15 = arith.constant 0 : index
    %c0_16 = arith.constant 0 : index
    %21 = vector.load %arg6[%c0_15, %c0_16] : memref<4x16xf32, #tpu.memory_space<vmem>>, vector<4x16xf32>
    %cst_17 = arith.constant dense<0.000000e+00> : vector<2x16xf32>
    %22 = tpu.matmul %10, %21, %cst_17 {dimension_numbers = #tpu.dot_dimension_numbers<[1], [0], [0], [1], [0, 0, 1, 1], [], []>} : vector<2x4xf32>, vector<4x16xf32>, vector<2x16xf32> -> vector<2x16xf32>
    %c0_18 = arith.constant 0 : index
    %c0_19 = arith.constant 0 : index
    %23 = vector.load %arg7[%c0_18, %c0_19] : memref<1x16xf32, #tpu.memory_space<vmem>>, vector<1x16xf32>
    %24 = vector.broadcast %23 : vector<1x16xf32> to vector<2x16xf32>
    %25 = arith.addf %22, %24 : vector<2x16xf32>
    %26 = math.tanh %25 : vector<2x16xf32>
    %c0_20 = arith.constant 0 : index
    %c0_21 = arith.constant 0 : index
    %27 = vector.load %arg8[%c0_20, %c0_21] : memref<4x16xf32, #tpu.memory_space<vmem>>, vector<4x16xf32>
    %cst_22 = arith.constant dense<0.000000e+00> : vector<2x16xf32>
    %28 = tpu.matmul %10, %27, %cst_22 {dimension_numbers = #tpu.dot_dimension_numbers<[1], [0], [0], [1], [0, 0, 1, 1], [], []>} : vector<2x4xf32>, vector<4x16xf32>, vector<2x16xf32> -> vector<2x16xf32>
    %c0_23 = arith.constant 0 : index
    %c0_24 = arith.constant 0 : index
    %29 = vector.load %arg9[%c0_23, %c0_24] : memref<1x16xf32, #tpu.memory_space<vmem>>, vector<1x16xf32>
    %30 = vector.broadcast %29 : vector<1x16xf32> to vector<2x16xf32>
    %31 = arith.addf %28, %30 : vector<2x16xf32>
    %32 = arith.negf %31 : vector<2x16xf32>
    %33 = math.exp %32 : vector<2x16xf32>
    %cst_25 = arith.constant 1.000000e+00 : f32
    %34 = vector.broadcast %cst_25 : f32 to vector<2x16xf32>
    %35 = arith.addf %34, %33 : vector<2x16xf32>
    %36 = arith.divf %34, %35 : vector<2x16xf32>
    %37 = arith.mulf %20, %26 : vector<2x16xf32>
    %38 = arith.negf %37 : vector<2x16xf32>
    %39 = math.exp %38 : vector<2x16xf32>
    %cst_26 = arith.constant 1.000000e+00 : f32
    %40 = vector.broadcast %cst_26 : f32 to vector<2x16xf32>
    %41 = arith.addf %40, %39 : vector<2x16xf32>
    %42 = arith.divf %40, %41 : vector<2x16xf32>
    %43 = arith.mulf %36, %42 : vector<2x16xf32>
    %cst_27 = arith.constant 1.000000e+00 : f32
    %44 = vector.broadcast %cst_27 : f32 to vector<2x16xf32>
    %45 = arith.addf %44, %43 : vector<2x16xf32>
    %46 = vector.shape_cast %45 : vector<2x16xf32> to vector<2x16x1xf32>
    %47 = vector.broadcast %46 : vector<2x16x1xf32> to vector<2x16x256xf32>
    %48 = arith.mulf %0, %47 : vector<2x16x256xf32>
    %cst_28 = arith.constant 0.000000e+00 : f32
    %49 = vector.broadcast %cst_28 : f32 to vector<2x16x256xf32>
    %50 = arith.maximumf %48, %49 : vector<2x16x256xf32>
    %c0_29 = arith.constant 0 : index
    %c0_30 = arith.constant 0 : index
    %c0_31 = arith.constant 0 : index
    %51 = vector.load %arg10[%c0_29, %c0_30, %c0_31] : memref<2x16x256xf32, #tpu.memory_space<vmem>>, vector<2x16x256xf32>
    tpu.vector_store %arg10[%c0_29, %c0_30, %c0_31], %50 {strides = array<i32>} : memref<2x16x256xf32, #tpu.memory_space<vmem>>, vector<2x16x256xf32>,
    return
  }
  func.func @transform_0(%arg0: i32) -> (i32, i32, i32) {
    %c0_i32 = arith.constant 0 : i32
    %c0_i32_0 = arith.constant 0 : i32
    %c0_i32_1 = arith.constant 0 : i32
    return %arg0, %c0_i32, %c0_i32_0 : i32, i32, i32
  }
  func.func @transform_1(%arg0: i32) -> (i32, i32) {
    %c0_i32 = arith.constant 0 : i32
    %c0_i32_0 = arith.constant 0 : i32
    %c0_i32_1 = arith.constant 0 : i32
    return %c0_i32, %c0_i32_0 : i32, i32
  }
  func.func @transform_2(%arg0: i32) -> (i32, i32) {
    %c0_i32 = arith.constant 0 : i32
    %c0_i32_0 = arith.constant 0 : i32
    %c0_i32_1 = arith.constant 0 : i32
    return %c0_i32, %c0_i32_0 : i32, i32
  }
  func.func @transform_3(%arg0: i32) -> (i32, i32) {
    %c0_i32 = arith.constant 0 : i32
    %c0_i32_0 = arith.constant 0 : i32
    %c0_i32_1 = arith.constant 0 : i32
    return %c0_i32, %c0_i32_0 : i32, i32
  }
  func.func @transform_4(%arg0: i32) -> (i32, i32) {
    %c0_i32 = arith.constant 0 : i32
    %c0_i32_0 = arith.constant 0 : i32
    %c0_i32_1 = arith.constant 0 : i32
    return %c0_i32, %c0_i32_0 : i32, i32
  }
  func.func @transform_5(%arg0: i32) -> (i32, i32) {
    %c0_i32 = arith.constant 0 : i32
    %c0_i32_0 = arith.constant 0 : i32
    %c0_i32_1 = arith.constant 0 : i32
    return %c0_i32, %c0_i32_0 : i32, i32
  }
  func.func @transform_6(%arg0: i32) -> (i32, i32) {
    %c0_i32 = arith.constant 0 : i32
    %c0_i32_0 = arith.constant 0 : i32
    %c0_i32_1 = arith.constant 0 : i32
    return %c0_i32, %c0_i32_0 : i32, i32
  }
  func.func @transform_7(%arg0: i32) -> (i32, i32) {
    %c0_i32 = arith.constant 0 : i32
    %c0_i32_0 = arith.constant 0 : i32
    %c0_i32_1 = arith.constant 0 : i32
    return %c0_i32, %c0_i32_0 : i32, i32
  }
  func.func @transform_8(%arg0: i32) -> (i32, i32) {
    %c0_i32 = arith.constant 0 : i32
    %c0_i32_0 = arith.constant 0 : i32
    %c0_i32_1 = arith.constant 0 : i32
    return %c0_i32, %c0_i32_0 : i32, i32
  }
  func.func @transform_9(%arg0: i32) -> (i32, i32, i32) {
    %c0_i32 = arith.constant 0 : i32
    %c0_i32_0 = arith.constant 0 : i32
    %c0_i32_1 = arith.constant 0 : i32
    return %arg0, %c0_i32, %c0_i32_0 : i32, i32, i32
  }
}

</mosaic_0001>

<llo_original>
// kernel: attention_forward.1
$region0: #{attention_forward.1}
  #allocation0 [shape = 'u32[]', space=smem, size = 0x4, offset = 0x4, fixed_abs, tag = 'smem constant byte address 0x4 - core index']
  #allocation1 [shape = 'u32[144,128]{1,0:T(1,128)}', space=vmem, size = 0x12000, scoped, tag = 'internal scratch']
  %s0 = inlined_call_operand.vmem [shape: f32[4,16,256], index: 0, kind: input, shape index: {}]
  %s1 = inlined_call_operand.vmem [shape: f32[16,4], index: 1, kind: input, shape index: {}]
  %s2 = inlined_call_operand.vmem [shape: f32[1,4], index: 2, kind: input, shape index: {}]
  %s3 = inlined_call_operand.vmem [shape: f32[4,16], index: 3, kind: input, shape index: {}]
  %s4 = inlined_call_operand.vmem [shape: f32[1,16], index: 4, kind: input, shape index: {}]
  %s5 = inlined_call_operand.vmem [shape: f32[4,16], index: 5, kind: input, shape index: {}]
  %s6 = inlined_call_operand.vmem [shape: f32[1,16], index: 6, kind: input, shape index: {}]
  %s7 = inlined_call_operand.vmem [shape: f32[4,16], index: 7, kind: input, shape index: {}]
  %s8 = inlined_call_operand.vmem [shape: f32[1,16], index: 8, kind: input, shape index: {}]
  %s9 = inlined_call_operand.vmem [shape: f32[4,16,256], index: 9, kind: output, shape index: {}]
  %s10 = sld [smem:[#allocation0]]
  $region69: #{attention_forward.1} parent=0
    _
  %s12 = ssub.s32 1, %s10
  %s13 = scalar_select 0, %s12, %s10
  loop: start=0, step=1, limit=4
  $region2: #{attention_forward.1} parent=0 // loop_pre_header
    _
  $region3: #{attention_forward.1} parent=0 // loop_header
    %s15 = sphi 0, %s19
    %p16 = scmp.ge.s32.totalorder %s15, 4
    %s25 = sphi 0, %s27
    %s28 = sphi 0, %s25
    %s29 = sphi 0, %s28
    %s45 = sphi 0, %s29
    %s49 = sphi 0, %s49
    %s51 = sphi 0, %s49
    %s52 = sphi 0, %s51
    %s66 = sphi 0, %s52
    %s70 = sphi 0, %s70
    %s72 = sphi 0, %s70
    %s73 = sphi 0, %s72
    %s87 = sphi 0, %s73
    %s91 = sphi 0, %s91
    %s93 = sphi 0, %s91
    %s94 = sphi 0, %s93
    %s108 = sphi 0, %s94
    %s112 = sphi 0, %s112
    %s114 = sphi 0, %s112
    %s115 = sphi 0, %s114
    %s129 = sphi 0, %s115
    %s133 = sphi 0, %s133
    %s135 = sphi 0, %s133
    %s136 = sphi 0, %s135
    %s150 = sphi 0, %s136
    %s154 = sphi 0, %s154
    %s156 = sphi 0, %s154
    %s157 = sphi 0, %s156
    %s171 = sphi 0, %s157
    %s175 = sphi 0, %s175
    %s177 = sphi 0, %s175
    %s178 = sphi 0, %s177
    %s192 = sphi 0, %s178
    %s196 = sphi 0, %s196
    %s198 = sphi 0, %s196
    %s199 = sphi 0, %s198
    %s213 = sphi 0, %s199
    %s219 = sphi 0, %s221
    %s222 = sphi 0, %s219
    %s223 = sphi 0, %s222
    %s239 = sphi 0, %s223
  $region4: #{attention_forward.1} parent=0 // loop_header_branch
    %18 = sbr.rel (%p16) target = $region8
  $region5: #{attention_forward.1} parent=0 // loop_body
    %s20 = ssub.s32 %s15, 1
    %s21 = ssub.s32 %s15, 2
    %s22 = sadd.s32 %s15, 1
    %s23 = ssub.s32 %s15, %s22
    %p24 = scmp.eq.s32.totalorder %s23, 0
    %s26 = sadd.s32 %s25, 1
    %s27 = scalar_select %p24, %s25, %s26
    %p30 = pneg %p24
    %p31 = scmp.eq.s32.totalorder %s15, 1
    %p32 = por %p30, %p31
    %p33 = scmp.ne.s32.totalorder %s25, %s28
    %p34 = scmp.eq.s32.totalorder %s15, 0
    %p35 = por %p33, %p34
    %p36 = scmp.ne.s32.totalorder %s25, %s28
    %p37 = scmp.eq.s32.totalorder %s20, 1
    %p38 = por %p36, %p37
    %p39 = scmp.ne.s32.totalorder %s28, %s29
    %p40 = scmp.eq.s32.totalorder %s20, 0
    %p41 = por %p39, %p40
    %p42 = scmp.ne.s32.totalorder %s28, %s29
    %p43 = scmp.eq.s32.totalorder %s21, 1
    %p44 = por %p42, %p43
    %p46 = scmp.ne.s32.totalorder %s29, %s45
    %p47 = scmp.eq.s32.totalorder %s21, 0
    %p48 = por %p46, %p47
    %s50 = sadd.s32 %s49, 1
    %p53 = scmp.eq.s32.totalorder %s15, 1
    %p54 = scmp.ne.s32.totalorder %s49, %s51
    %p55 = scmp.eq.s32.totalorder %s15, 0
    %p56 = por %p54, %p55
    %p57 = scmp.ne.s32.totalorder %s49, %s51
    %p58 = scmp.eq.s32.totalorder %s20, 1
    %p59 = por %p57, %p58
    %p60 = scmp.ne.s32.totalorder %s51, %s52
    %p61 = scmp.eq.s32.totalorder %s20, 0
    %p62 = por %p60, %p61
    %p63 = scmp.ne.s32.totalorder %s51, %s52
    %p64 = scmp.eq.s32.totalorder %s21, 1
    %p65 = por %p63, %p64
    %p67 = scmp.ne.s32.totalorder %s52, %s66
    %p68 = scmp.eq.s32.totalorder %s21, 0
    %p69 = por %p67, %p68
    %s71 = sadd.s32 %s70, 1
    %p74 = scmp.eq.s32.totalorder %s15, 1
    %p75 = scmp.ne.s32.totalorder %s70, %s72
    %p76 = scmp.eq.s32.totalorder %s15, 0
    %p77 = por %p75, %p76
    %p78 = scmp.ne.s32.totalorder %s70, %s72
    %p79 = scmp.eq.s32.totalorder %s20, 1
    %p80 = por %p78, %p79
    %p81 = scmp.ne.s32.totalorder %s72, %s73
    %p82 = scmp.eq.s32.totalorder %s20, 0
    %p83 = por %p81, %p82
    %p84 = scmp.ne.s32.totalorder %s72, %s73
    %p85 = scmp.eq.s32.totalorder %s21, 1
    %p86 = por %p84, %p85
    %p88 = scmp.ne.s32.totalorder %s73, %s87
    %p89 = scmp.eq.s32.totalorder %s21, 0
    %p90 = por %p88, %p89
    %s92 = sadd.s32 %s91, 1
    %p95 = scmp.eq.s32.totalorder %s15, 1
    %p96 = scmp.ne.s32.totalorder %s91, %s93
    %p97 = scmp.eq.s32.totalorder %s15, 0
    %p98 = por %p96, %p97
    %p99 = scmp.ne.s32.totalorder %s91, %s93
    %p100 = scmp.eq.s32.totalorder %s20, 1
    %p101 = por %p99, %p100
    %p102 = scmp.ne.s32.totalorder %s93, %s94
    %p103 = scmp.eq.s32.totalorder %s20, 0
    %p104 = por %p102, %p103
    %p105 = scmp.ne.s32.totalorder %s93, %s94
    %p106 = scmp.eq.s32.totalorder %s21, 1
    %p107 = por %p105, %p106
    %p109 = scmp.ne.s32.totalorder %s94, %s108
    %p110 = scmp.eq.s32.totalorder %s21, 0
    %p111 = por %p109, %p110
    %s113 = sadd.s32 %s112, 1
    %p116 = scmp.eq.s32.totalorder %s15, 1
    %p117 = scmp.ne.s32.totalorder %s112, %s114
    %p118 = scmp.eq.s32.totalorder %s15, 0
    %p119 = por %p117, %p118
    %p120 = scmp.ne.s32.totalorder %s112, %s114
    %p121 = scmp.eq.s32.totalorder %s20, 1
    %p122 = por %p120, %p121
    %p123 = scmp.ne.s32.totalorder %s114, %s115
    %p124 = scmp.eq.s32.totalorder %s20, 0
    %p125 = por %p123, %p124
    %p126 = scmp.ne.s32.totalorder %s114, %s115
    %p127 = scmp.eq.s32.totalorder %s21, 1
    %p128 = por %p126, %p127
    %p130 = scmp.ne.s32.totalorder %s115, %s129
    %p131 = scmp.eq.s32.totalorder %s21, 0
    %p132 = por %p130, %p131
    %s134 = sadd.s32 %s133, 1
    %p137 = scmp.eq.s32.totalorder %s15, 1
    %p138 = scmp.ne.s32.totalorder %s133, %s135
    %p139 = scmp.eq.s32.totalorder %s15, 0
    %p140 = por %p138, %p139
    %p141 = scmp.ne.s32.totalorder %s133, %s135
    %p142 = scmp.eq.s32.totalorder %s20, 1
    %p143 = por %p141, %p142
    %p144 = scmp.ne.s32.totalorder %s135, %s136
    %p145 = scmp.eq.s32.totalorder %s20, 0
    %p146 = por %p144, %p145
    %p147 = scmp.ne.s32.totalorder %s135, %s136
    %p148 = scmp.eq.s32.totalorder %s21, 1
    %p149 = por %p147, %p148
    %p151 = scmp.ne.s32.totalorder %s136, %s150
    %p152 = scmp.eq.s32.totalorder %s21, 0
    %p153 = por %p151, %p152
    %s155 = sadd.s32 %s154, 1
    %p158 = scmp.eq.s32.totalorder %s15, 1
    %p159 = scmp.ne.s32.totalorder %s154, %s156
    %p160 = scmp.eq.s32.totalorder %s15, 0
    %p161 = por %p159, %p160
    %p162 = scmp.ne.s32.totalorder %s154, %s156
    %p163 = scmp.eq.s32.totalorder %s20, 1
    %p164 = por %p162, %p163
    %p165 = scmp.ne.s32.totalorder %s156, %s157
    %p166 = scmp.eq.s32.totalorder %s20, 0
    %p167 = por %p165, %p166
    %p168 = scmp.ne.s32.totalorder %s156, %s157
    %p169 = scmp.eq.s32.totalorder %s21, 1
    %p170 = por %p168, %p169
    %p172 = scmp.ne.s32.totalorder %s157, %s171
    %p173 = scmp.eq.s32.totalorder %s21, 0
    %p174 = por %p172, %p173
    %s176 = sadd.s32 %s175, 1
    %p179 = scmp.eq.s32.totalorder %s15, 1
    %p180 = scmp.ne.s32.totalorder %s175, %s177
    %p181 = scmp.eq.s32.totalorder %s15, 0
    %p182 = por %p180, %p181
    %p183 = scmp.ne.s32.totalorder %s175, %s177
    %p184 = scmp.eq.s32.totalorder %s20, 1
    %p185 = por %p183, %p184
    %p186 = scmp.ne.s32.totalorder %s177, %s178
    %p187 = scmp.eq.s32.totalorder %s20, 0
    %p188 = por %p186, %p187
    %p189 = scmp.ne.s32.totalorder %s177, %s178
    %p190 = scmp.eq.s32.totalorder %s21, 1
    %p191 = por %p189, %p190
    %p193 = scmp.ne.s32.totalorder %s178, %s192
    %p194 = scmp.eq.s32.totalorder %s21, 0
    %p195 = por %p193, %p194
    %s197 = sadd.s32 %s196, 1
    %p200 = scmp.eq.s32.totalorder %s15, 1
    %p201 = scmp.ne.s32.totalorder %s196, %s198
    %p202 = scmp.eq.s32.totalorder %s15, 0
    %p203 = por %p201, %p202
    %p204 = scmp.ne.s32.totalorder %s196, %s198
    %p205 = scmp.eq.s32.totalorder %s20, 1
    %p206 = por %p204, %p205
    %p207 = scmp.ne.s32.totalorder %s198, %s199
    %p208 = scmp.eq.s32.totalorder %s20, 0
    %p209 = por %p207, %p208
    %p210 = scmp.ne.s32.totalorder %s198, %s199
    %p211 = scmp.eq.s32.totalorder %s21, 1
    %p212 = por %p210, %p211
    %p214 = scmp.ne.s32.totalorder %s199, %s213
    %p215 = scmp.eq.s32.totalorder %s21, 0
    %p216 = por %p214, %p215
    %s217 = ssub.s32 %s15, %s22
    %p218 = scmp.eq.s32.totalorder %s217, 0
    %s220 = sadd.s32 %s219, 1
    %s221 = scalar_select %p218, %s219, %s220
    %p224 = pneg %p218
    %p225 = scmp.eq.s32.totalorder %s15, 1
    %p226 = por %p224, %p225
    %p227 = scmp.ne.s32.totalorder %s219, %s222
    %p228 = scmp.eq.s32.totalorder %s15, 0
    %p229 = por %p227, %p228
    %p230 = scmp.ne.s32.totalorder %s219, %s222
    %p231 = scmp.eq.s32.totalorder %s20, 1
    %p232 = por %p230, %p231
    %p233 = scmp.ne.s32.totalorder %s222, %s223
    %p234 = scmp.eq.s32.totalorder %s20, 0
    %p235 = por %p233, %p234
    %p236 = scmp.ne.s32.totalorder %s222, %s223
    %p237 = scmp.eq.s32.totalorder %s21, 1
    %p238 = por %p236, %p237
    %p240 = scmp.ne.s32.totalorder %s223, %s239
    %p241 = scmp.eq.s32.totalorder %s21, 0
    %p242 = por %p240, %p241
    %p243 = scmp.le.s32.totalorder 1, %s15
    %p244 = scmp.lt.s32.totalorder %s15, 3
    %p245 = pnand %p243, %p244
    %p246 = pneg %p245
    // Predicated region
    $region9: #{attention_forward.1} parent=5 // pred_check
      _
    $region10: #{attention_forward.1} parent=5 // pred_check_branch
      %248 = sbr.rel (%p245) target = $region12
    $region11: #{attention_forward.1} parent=5 // pred_region
      %s249 = ssub.s32 %s15, 1
      // Predicated region
      $region13: #{attention_forward.1} parent=11 // pred_check
        %p250 = pneg %p62
      $region14: #{attention_forward.1} parent=11 // pred_check_branch
        %252 = sbr.rel (%p250) target = $region16
      $region15: #{attention_forward.1} parent=11 // pred_region
        _
      $region16: #{attention_forward.1} parent=11 // pred_fallthru
        _
      // Predicated region
      $region17: #{attention_forward.1} parent=11 // pred_check
        %p253 = pneg %p83
      $region18: #{attention_forward.1} parent=11 // pred_check_branch
        %255 = sbr.rel (%p253) target = $region20
      $region19: #{attention_forward.1} parent=11 // pred_region
        _
      $region20: #{attention_forward.1} parent=11 // pred_fallthru
        _
      // Predicated region
      $region21: #{attention_forward.1} parent=11 // pred_check
        %p256 = pneg %p104
      $region22: #{attention_forward.1} parent=11 // pred_check_branch
        %258 = sbr.rel (%p256) target = $region24
      $region23: #{attention_forward.1} parent=11 // pred_region
        _
      $region24: #{attention_forward.1} parent=11 // pred_fallthru
        _
      // Predicated region
      $region25: #{attention_forward.1} parent=11 // pred_check
        %p259 = pneg %p125
      $region26: #{attention_forward.1} parent=11 // pred_check_branch
        %261 = sbr.rel (%p259) target = $region28
      $region27: #{attention_forward.1} parent=11 // pred_region
        _
      $region28: #{attention_forward.1} parent=11 // pred_fallthru
        _
      // Predicated region
      $region29: #{attention_forward.1} parent=11 // pred_check
        %p262 = pneg %p146
      $region30: #{attention_forward.1} parent=11 // pred_check_branch
        %264 = sbr.rel (%p262) target = $region32
      $region31: #{attention_forward.1} parent=11 // pred_region
        _
      $region32: #{attention_forward.1} parent=11 // pred_fallthru
        _
      // Predicated region
      $region33: #{attention_forward.1} parent=11 // pred_check
        %p265 = pneg %p167
      $region34: #{attention_forward.1} parent=11 // pred_check_branch
        %267 = sbr.rel (%p265) target = $region36
      $region35: #{attention_forward.1} parent=11 // pred_region
        _
      $region36: #{attention_forward.1} parent=11 // pred_fallthru
        _
      // Predicated region
      $region37: #{attention_forward.1} parent=11 // pred_check
        %p268 = pneg %p188
      $region38: #{attention_forward.1} parent=11 // pred_check_branch
        %270 = sbr.rel (%p268) target = $region40
      $region39: #{attention_forward.1} parent=11 // pred_region
        _
      $region40: #{attention_forward.1} parent=11 // pred_fallthru
        _
      // Predicated region
      $region41: #{attention_forward.1} parent=11 // pred_check
        %p271 = pneg %p209
      $region42: #{attention_forward.1} parent=11 // pred_check_branch
        %273 = sbr.rel (%p271) target = $region44
      $region43: #{attention_forward.1} parent=11 // pred_region
        _
      $region44: #{attention_forward.1} parent=11 // pred_fallthru
        _
    $region12: #{attention_forward.1} parent=5 // pred_fallthru
      _
    %p274 = scmp.lt.s32.totalorder %s15, 2
    // Predicated region
    $region45: #{attention_forward.1} parent=5 // pred_check
      %p275 = pneg %p274
    $region46: #{attention_forward.1} parent=5 // pred_check_branch
      %277 = sbr.rel (%p275) target = $region48
    $region47: #{attention_forward.1} parent=5 // pred_region
      // Predicated region
      $region49: #{attention_forward.1} parent=47 // pred_check
        %p278 = pneg %p35
      $region50: #{attention_forward.1} parent=47 // pred_check_branch
        %280 = sbr.rel (%p278) target = $region52
      $region51: #{attention_forward.1} parent=47 // pred_region
        %s281 = smul.u32 2, %s15
        %p282 = scmp.lt.s32.totalorder %s281, 3
        %s283 = scalar_select %p282, %s281, 3
        %s284 = smul.addr %s283, 4
        %s285 = smul.addr %s284, 8
        %s286 = scalar_lea.vmem %s0, %s285
        %s287 = smul.u32 2, %s15
      $region52: #{attention_forward.1} parent=47 // pred_fallthru
        _
    $region48: #{attention_forward.1} parent=5 // pred_fallthru
      _
    %p288 = scmp.le.s32.totalorder 1, %s15
    %p289 = scmp.lt.s32.totalorder %s15, 3
    %p290 = pnand %p288, %p289
    %p291 = pneg %p290
    // Predicated region
    $region53: #{attention_forward.1} parent=5 // pred_check
      _
    $region54: #{attention_forward.1} parent=5 // pred_check_branch
      %293 = sbr.rel (%p290) target = $region56
    $region55: #{attention_forward.1} parent=5 // pred_region
      %s294 = ssub.s32 %s15, 1
      %s295 = smul.u32 2, %s20
      %p296 = scmp.lt.s32.totalorder %s295, 3
      %s297 = scalar_select %p296, %s295, 3
      %s298 = smul.addr %s297, 4
      %s299 = smul.addr %s298, 8
      %s300 = scalar_lea.vmem %s0, %s299
      %p301 = pneg %p41
      %p302 = pneg %p38
      %p303 = pneg %p62
      %p304 = pneg %p59
      %p305 = pneg %p83
      %p306 = pneg %p80
      %p307 = pneg %p104
      %p308 = pneg %p101
      %p309 = pneg %p125
      %p310 = pneg %p122
      %p311 = pneg %p146
      %p312 = pneg %p143
      %p313 = pneg %p167
      %p314 = pneg %p164
      %p315 = pneg %p188
      %p316 = pneg %p185
      %p317 = pneg %p209
      %p318 = pneg %p206
      %p319 = pneg %p235
      %p320 = pneg %p232
      %s321 = smul.u32 2, %s20
      %p322 = scmp.lt.s32.totalorder %s321, 3
      %s323 = scalar_select %p322, %s321, 3
      %s324 = smul.addr %s323, 4
      %s325 = smul.addr %s324, 8
      %s326 = scalar_lea.vmem %s9, %s325
      %s327 = smul.u32 2, %s20
      %p328 = scmp.lt.s32.totalorder %s327, 3
      %s329 = scalar_select %p328, %s327, 3
      %s330 = smul.addr %s329, 4
      %s331 = smul.addr %s330, 8
      %s332 = scalar_lea.vmem %s0, %s331
      %s333 = smul.u32 2, %s20
      %s334 = smul.u32 2, %s20
      %p335 = scmp.lt.s32.totalorder %s334, 3
      %s336 = scalar_select %p335, %s334, 3
      %s337 = smul.addr %s336, 4
      %s338 = smul.addr %s337, 8
      %s339 = scalar_lea.vmem %s9, %s338
      %s340 = smul.u32 2, %s20
      %v341 = vld [vmem:[%s332] sm:$0xff]
      %v342 = vld [vmem:[%s332 + $0x8] sm:$0xff]
      %v343 = vld [vmem:[%s332 + $0x10] sm:$0xff]
      %v344 = vld [vmem:[%s332 + $0x18] sm:$0xff]
      %v345 = vld [vmem:[%s332 + $0x20] sm:$0xff]
      %v346 = vld [vmem:[%s332 + $0x28] sm:$0xff]
      %v347 = vld [vmem:[%s332 + $0x30] sm:$0xff]
      %v348 = vld [vmem:[%s332 + $0x38] sm:$0xff]
      %v349 = vadd.f32 %v341, %v342
      %350 = vadd.xlane.f32.xlu0 %v349
      %v351 = vpop.xlane.xlu0 %350
      %v352 = vadd.f32 %v343, %v344
      %353 = vadd.xlane.f32.xlu0 %v352
      %v354 = vpop.xlane.xlu0 %353
      %v355 = vadd.f32 %v345, %v346
      %356 = vadd.xlane.f32.xlu0 %v355
      %v357 = vpop.xlane.xlu0 %356
      %v358 = vadd.f32 %v347, %v348
      %359 = vadd.xlane.f32.xlu0 %v358
      %v360 = vpop.xlane.xlu0 %359
      %v361 = vmul.f32 %v351, 0.00390625
      %v362 = vmul.f32 %v354, 0.00390625
      %v363 = vmul.f32 %v357, 0.00390625
      %v364 = vmul.f32 %v360, 0.00390625
      %v365 = vld [vmem:[%s1] sm:$0xff]
      %v366 = vld [vmem:[%s1 + $0x8] sm:$0xff]
      %v367 = vld [vmem:[%s2] sm:$0x1]
      %v369 = vlaneseq
      %v370 = vshrl.u32 %v369, 7
      %v371 = vsub.s32 0, %v370
      %v372 = vrot.slane %v367, %v371
      %v378 = vlaneseq
      %v379 = vand.u32 %v378, 127
      %v380 = vlaneseq
      %v381 = vshrl.u32 %v380, 7
      %v382 = vsub.s32 %v379, %v381
      %v383 = vrot.slane %v361, %v382
      %v384 = vadd.s32 %v379, 4294967288
      %v385 = vlaneseq
      %v386 = vshrl.u32 %v385, 7
      %v387 = vsub.s32 %v384, %v386
      %v388 = vrot.slane %v362, %v387
      %vm389 = vcmask 130112
      %v390 = vsel %vm389, %v388, %v383
      %v391 = vlaneseq
      %v392 = vshrl.u32 %v391, 7
      %v393 = vsub.s32 %v379, %v392
      %v394 = vrot.slane %v363, %v393
      %v395 = vlaneseq
      %v396 = vshrl.u32 %v395, 7
      %v397 = vsub.s32 %v384, %v396
      %v398 = vrot.slane %v364, %v397
      %v399 = vsel %vm389, %v398, %v394
      %vm400 = vcmask 1041409
      %v401 = vsel %vm400, %v399, %v390
      %vm402 = vcmask 130048
      %v403 = vsel %vm402, %v401, 0
      %405 = vmatprep.subr.mxu0 0.0
      %406 = vmatpush1.msra.mxu0 %v365
      %407 = vmatprep.subr.mxu0 0.0
      %408 = vmatpush1.msra.mxu0 %v366
      %409 = vmatprep.subr.mxu0 0.0
      %410 = vmatpush1.msra.mxu0 0.0
      %411 = vmatprep.subr.mxu0 0.0
      %412 = vmatpush1.msra.mxu0 0.0
      %413 = vmatprep.subr.mxu0 0.0
      %414 = vmatpush1.msra.mxu0 0.0
      %415 = vmatprep.subr.mxu0 0.0
      %416 = vmatpush1.msra.mxu0 0.0
      %417 = vmatprep.subr.mxu0 0.0
      %418 = vmatpush1.msra.mxu0 0.0
      %419 = vmatprep.subr.mxu0 0.0
      %420 = vmatpush1.msra.mxu0 0.0
      %421 = vmatprep.subr.mxu0 0.0
      %422 = vmatpush1.msra.mxu0 0.0
      %423 = vmatprep.subr.mxu0 0.0
      %424 = vmatpush1.msra.mxu0 0.0
      %425 = vmatprep.subr.mxu0 0.0
      %426 = vmatpush1.msra.mxu0 0.0
      %427 = vmatprep.subr.mxu0 0.0
      %428 = vmatpush1.msra.mxu0 0.0
      %429 = vmatprep.subr.mxu0 0.0
      %430 = vmatpush1.msra.mxu0 0.0
      %431 = vmatprep.subr.mxu0 0.0
      %432 = vmatpush1.msra.mxu0 0.0
      %433 = vmatprep.subr.mxu0 0.0
      %434 = vmatpush1.msra.mxu0 0.0
      %435 = vmatprep.subr.mxu0 0.0
      %436 = vmatpush1.msra.mxu0 0.0
      %437 = vmatprep.subr.mxu0 0.0
      %438 = vmatpush1.msra.mxu0 0.0
      %439 = vmatprep.subr.mxu0 0.0
      %440 = vmatpush1.msra.mxu0 0.0
      %441 = vmatprep.subr.mxu0 0.0
      %442 = vmatpush1.msra.mxu0 0.0
      %443 = vmatprep.subr.mxu0 0.0
      %444 = vmatpush1.msra.mxu0 0.0
      %445 = vmatprep.subr.mxu0 0.0
      %446 = vmatpush1.msra.mxu0 0.0
      %447 = vmatprep.subr.mxu0 0.0
      %448 = vmatpush1.msra.mxu0 0.0
      %449 = vmatprep.subr.mxu0 0.0
      %450 = vmatpush1.msra.mxu0 0.0
      %451 = vmatprep.subr.mxu0 0.0
      %452 = vmatpush1.msra.mxu0 0.0
      %453 = vmatprep.subr.mxu0 0.0
      %454 = vmatpush1.msra.mxu0 0.0
      %455 = vmatprep.subr.mxu0 0.0
      %456 = vmatpush1.msra.mxu0 0.0
      %457 = vmatprep.subr.mxu0 0.0
      %458 = vmatpush1.msra.mxu0 0.0
      %459 = vmatprep.subr.mxu0 0.0
      %460 = vmatpush1.msra.mxu0 0.0
      %461 = vmatprep.subr.mxu0 0.0
      %462 = vmatpush1.msra.mxu0 0.0
      %463 = vmatprep.subr.mxu0 0.0
      %464 = vmatpush1.msra.mxu0 0.0
      %465 = vmatprep.subr.mxu0 0.0
      %466 = vmatpush1.msra.mxu0 0.0
      %467 = vmatprep.subr.mxu0 0.0
      %468 = vmatpush1.msra.mxu0 0.0
      %469 = vmatprep.mubr.f32.mxu0 0.0
      %470 = vmatmul.mubr.f32.gmra.mrb[0].mxu0 %v403
      %v471 = vpop.f32.mrb[0].mxu0
      %v472 = vadd.f32 %v372, %v471
      %v473 = vpop.f32.mrb[0].mxu0
      %474 = vdwg.mxu0
      %v475 = vmax.f32 %v472, 0.0
      %v476 = vld [vmem:[%s3] sm:$0xf]
      %v477 = vld [vmem:[%s4] sm:$0x1]
      %v479 = vlaneseq
      %v480 = vshrl.u32 %v479, 7
      %v481 = vsub.s32 0, %v480
      %v482 = vrot.slane %v477, %v481
      %vm484 = vcmask 31744
      %v486 = vsel %vm484, %v475, 0
      %vm488 = vcmask 1043456
      %v490 = vsel %vm488, %v476, 0
      %492 = vmatprep.subr.mxu0 0.0
      %493 = vmatpush1.msra.mxu0 %v490
      %494 = vmatprep.subr.mxu0 0.0
      %495 = vmatpush1.msra.mxu0 0.0
      %496 = vmatprep.subr.mxu0 0.0
      %497 = vmatpush1.msra.mxu0 0.0
      %498 = vmatprep.subr.mxu0 0.0
      %499 = vmatpush1.msra.mxu0 0.0
      %500 = vmatprep.subr.mxu0 0.0
      %501 = vmatpush1.msra.mxu0 0.0
      %502 = vmatprep.subr.mxu0 0.0
      %503 = vmatpush1.msra.mxu0 0.0
      %504 = vmatprep.subr.mxu0 0.0
      %505 = vmatpush1.msra.mxu0 0.0
      %506 = vmatprep.subr.mxu0 0.0
      %507 = vmatpush1.msra.mxu0 0.0
      %508 = vmatprep.subr.mxu0 0.0
      %509 = vmatpush1.msra.mxu0 0.0
      %510 = vmatprep.subr.mxu0 0.0
      %511 = vmatpush1.msra.mxu0 0.0
      %512 = vmatprep.subr.mxu0 0.0
      %513 = vmatpush1.msra.mxu0 0.0
      %514 = vmatprep.subr.mxu0 0.0
      %515 = vmatpush1.msra.mxu0 0.0
      %516 = vmatprep.subr.mxu0 0.0
      %517 = vmatpush1.msra.mxu0 0.0
      %518 = vmatprep.subr.mxu0 0.0
      %519 = vmatpush1.msra.mxu0 0.0
      %520 = vmatprep.subr.mxu0 0.0
      %521 = vmatpush1.msra.mxu0 0.0
      %522 = vmatprep.subr.mxu0 0.0
      %523 = vmatpush1.msra.mxu0 0.0
      %524 = vmatprep.subr.mxu0 0.0
      %525 = vmatpush1.msra.mxu0 0.0
      %526 = vmatprep.subr.mxu0 0.0
      %527 = vmatpush1.msra.mxu0 0.0
      %528 = vmatprep.subr.mxu0 0.0
      %529 = vmatpush1.msra.mxu0 0.0
      %530 = vmatprep.subr.mxu0 0.0
      %531 = vmatpush1.msra.mxu0 0.0
      %532 = vmatprep.subr.mxu0 0.0
      %533 = vmatpush1.msra.mxu0 0.0
      %534 = vmatprep.subr.mxu0 0.0
      %535 = vmatpush1.msra.mxu0 0.0
      %536 = vmatprep.subr.mxu0 0.0
      %537 = vmatpush1.msra.mxu0 0.0
      %538 = vmatprep.subr.mxu0 0.0
      %539 = vmatpush1.msra.mxu0 0.0
      %540 = vmatprep.subr.mxu0 0.0
      %541 = vmatpush1.msra.mxu0 0.0
      %542 = vmatprep.subr.mxu0 0.0
      %543 = vmatpush1.msra.mxu0 0.0
      %544 = vmatprep.subr.mxu0 0.0
      %545 = vmatpush1.msra.mxu0 0.0
      %546 = vmatprep.subr.mxu0 0.0
      %547 = vmatpush1.msra.mxu0 0.0
      %548 = vmatprep.subr.mxu0 0.0
      %549 = vmatpush1.msra.mxu0 0.0
      %550 = vmatprep.subr.mxu0 0.0
      %551 = vmatpush1.msra.mxu0 0.0
      %552 = vmatprep.subr.mxu0 0.0
      %553 = vmatpush1.msra.mxu0 0.0
      %554 = vmatprep.subr.mxu0 0.0
      %555 = vmatpush1.msra.mxu0 0.0
      %556 = vmatprep.mubr.f32.mxu0 0.0
      %557 = vmatmul.mubr.f32.gmra.mrb[0].mxu0 %v486
      %v558 = vpop.f32.mrb[0].mxu0
      %v559 = vadd.f32 %v482, %v558
      %v560 = vpop.f32.mrb[0].mxu0
      %561 = vdwg.mxu0
      %v562 = vxor.u32 %v559, 2147483648
      %v563 = vmul.f32 %v562, 1.442695
      %v564 = vpow.pop %v563
      %v565 = vadd.f32 %v564, 1.0
      %v566 = vrcp.pop %v565
      %v567 = vmul.f32 1.0, %v566
      %v568 = vld [vmem:[%s5] sm:$0xf]
      %v569 = vld [vmem:[%s6] sm:$0x1]
      %v571 = vlaneseq
      %v572 = vshrl.u32 %v571, 7
      %v573 = vsub.s32 0, %v572
      %v574 = vrot.slane %v569, %v573
      %v577 = vsel %vm488, %v568, 0
      %579 = vmatprep.subr.mxu0 0.0
      %580 = vmatpush1.msra.mxu0 %v577
      %581 = vmatprep.subr.mxu0 0.0
      %582 = vmatpush1.msra.mxu0 0.0
      %583 = vmatprep.subr.mxu0 0.0
      %584 = vmatpush1.msra.mxu0 0.0
      %585 = vmatprep.subr.mxu0 0.0
      %586 = vmatpush1.msra.mxu0 0.0
      %587 = vmatprep.subr.mxu0 0.0
      %588 = vmatpush1.msra.mxu0 0.0
      %589 = vmatprep.subr.mxu0 0.0
      %590 = vmatpush1.msra.mxu0 0.0
      %591 = vmatprep.subr.mxu0 0.0
      %592 = vmatpush1.msra.mxu0 0.0
      %593 = vmatprep.subr.mxu0 0.0
      %594 = vmatpush1.msra.mxu0 0.0
      %595 = vmatprep.subr.mxu0 0.0
      %596 = vmatpush1.msra.mxu0 0.0
      %597 = vmatprep.subr.mxu0 0.0
      %598 = vmatpush1.msra.mxu0 0.0
      %599 = vmatprep.subr.mxu0 0.0
      %600 = vmatpush1.msra.mxu0 0.0
      %601 = vmatprep.subr.mxu0 0.0
      %602 = vmatpush1.msra.mxu0 0.0
      %603 = vmatprep.subr.mxu0 0.0
      %604 = vmatpush1.msra.mxu0 0.0
      %605 = vmatprep.subr.mxu0 0.0
      %606 = vmatpush1.msra.mxu0 0.0
      %607 = vmatprep.subr.mxu0 0.0
      %608 = vmatpush1.msra.mxu0 0.0
      %609 = vmatprep.subr.mxu0 0.0
      %610 = vmatpush1.msra.mxu0 0.0
      %611 = vmatprep.subr.mxu0 0.0
      %612 = vmatpush1.msra.mxu0 0.0
      %613 = vmatprep.subr.mxu0 0.0
      %614 = vmatpush1.msra.mxu0 0.0
      %615 = vmatprep.subr.mxu0 0.0
      %616 = vmatpush1.msra.mxu0 0.0
      %617 = vmatprep.subr.mxu0 0.0
      %618 = vmatpush1.msra.mxu0 0.0
      %619 = vmatprep.subr.mxu0 0.0
      %620 = vmatpush1.msra.mxu0 0.0
      %621 = vmatprep.subr.mxu0 0.0
      %622 = vmatpush1.msra.mxu0 0.0
      %623 = vmatprep.subr.mxu0 0.0
      %624 = vmatpush1.msra.mxu0 0.0
      %625 = vmatprep.subr.mxu0 0.0
      %626 = vmatpush1.msra.mxu0 0.0
      %627 = vmatprep.subr.mxu0 0.0
      %628 = vmatpush1.msra.mxu0 0.0
      %629 = vmatprep.subr.mxu0 0.0
      %630 = vmatpush1.msra.mxu0 0.0
      %631 = vmatprep.subr.mxu0 0.0
      %632 = vmatpush1.msra.mxu0 0.0
      %633 = vmatprep.subr.mxu0 0.0
      %634 = vmatpush1.msra.mxu0 0.0
      %635 = vmatprep.subr.mxu0 0.0
      %636 = vmatpush1.msra.mxu0 0.0
      %637 = vmatprep.subr.mxu0 0.0
      %638 = vmatpush1.msra.mxu0 0.0
      %639 = vmatprep.subr.mxu0 0.0
      %640 = vmatpush1.msra.mxu0 0.0
      %641 = vmatprep.subr.mxu0 0.0
      %642 = vmatpush1.msra.mxu0 0.0
      %643 = vmatprep.mubr.f32.mxu0 0.0
      %644 = vmatmul.mubr.f32.gmra.mrb[0].mxu0 %v486
      %v645 = vpop.f32.mrb[0].mxu0
      %v646 = vadd.f32 %v574, %v645
      %v647 = vpop.f32.mrb[0].mxu0
      %648 = vdwg.mxu0
      %v649 = vtanh.pop %v646
      %v650 = vld [vmem:[%s7] sm:$0xf]
      %v651 = vld [vmem:[%s8] sm:$0x1]
      %v653 = vlaneseq
      %v654 = vshrl.u32 %v653, 7
      %v655 = vsub.s32 0, %v654
      %v656 = vrot.slane %v651, %v655
      %v659 = vsel %vm488, %v650, 0
      %661 = vmatprep.subr.mxu0 0.0
      %662 = vmatpush1.msra.mxu0 %v659
      %663 = vmatprep.subr.mxu0 0.0
      %664 = vmatpush1.msra.mxu0 0.0
      %665 = vmatprep.subr.mxu0 0.0
      %666 = vmatpush1.msra.mxu0 0.0
      %667 = vmatprep.subr.mxu0 0.0
      %668 = vmatpush1.msra.mxu0 0.0
      %669 = vmatprep.subr.mxu0 0.0
      %670 = vmatpush1.msra.mxu0 0.0
      %671 = vmatprep.subr.mxu0 0.0
      %672 = vmatpush1.msra.mxu0 0.0
      %673 = vmatprep.subr.mxu0 0.0
      %674 = vmatpush1.msra.mxu0 0.0
      %675 = vmatprep.subr.mxu0 0.0
      %676 = vmatpush1.msra.mxu0 0.0
      %677 = vmatprep.subr.mxu0 0.0
      %678 = vmatpush1.msra.mxu0 0.0
      %679 = vmatprep.subr.mxu0 0.0
      %680 = vmatpush1.msra.mxu0 0.0
      %681 = vmatprep.subr.mxu0 0.0
      %682 = vmatpush1.msra.mxu0 0.0
      %683 = vmatprep.subr.mxu0 0.0
      %684 = vmatpush1.msra.mxu0 0.0
      %685 = vmatprep.subr.mxu0 0.0
      %686 = vmatpush1.msra.mxu0 0.0
      %687 = vmatprep.subr.mxu0 0.0
      %688 = vmatpush1.msra.mxu0 0.0
      %689 = vmatprep.subr.mxu0 0.0
      %690 = vmatpush1.msra.mxu0 0.0
      %691 = vmatprep.subr.mxu0 0.0
      %692 = vmatpush1.msra.mxu0 0.0
      %693 = vmatprep.subr.mxu0 0.0
      %694 = vmatpush1.msra.mxu0 0.0
      %695 = vmatprep.subr.mxu0 0.0
      %696 = vmatpush1.msra.mxu0 0.0
      %697 = vmatprep.subr.mxu0 0.0
      %698 = vmatpush1.msra.mxu0 0.0
      %699 = vmatprep.subr.mxu0 0.0
      %700 = vmatpush1.msra.mxu0 0.0
      %701 = vmatprep.subr.mxu0 0.0
      %702 = vmatpush1.msra.mxu0 0.0
      %703 = vmatprep.subr.mxu0 0.0
      %704 = vmatpush1.msra.mxu0 0.0
      %705 = vmatprep.subr.mxu0 0.0
      %706 = vmatpush1.msra.mxu0 0.0
      %707 = vmatprep.subr.mxu0 0.0
      %708 = vmatpush1.msra.mxu0 0.0
      %709 = vmatprep.subr.mxu0 0.0
      %710 = vmatpush1.msra.mxu0 0.0
      %711 = vmatprep.subr.mxu0 0.0
      %712 = vmatpush1.msra.mxu0 0.0
      %713 = vmatprep.subr.mxu0 0.0
      %714 = vmatpush1.msra.mxu0 0.0
      %715 = vmatprep.subr.mxu0 0.0
      %716 = vmatpush1.msra.mxu0 0.0
      %717 = vmatprep.subr.mxu0 0.0
      %718 = vmatpush1.msra.mxu0 0.0
      %719 = vmatprep.subr.mxu0 0.0
      %720 = vmatpush1.msra.mxu0 0.0
      %721 = vmatprep.subr.mxu0 0.0
      %722 = vmatpush1.msra.mxu0 0.0
      %723 = vmatprep.subr.mxu0 0.0
      %724 = vmatpush1.msra.mxu0 0.0
      %725 = vmatprep.mubr.f32.mxu0 0.0
      %726 = vmatmul.mubr.f32.gmra.mrb[0].mxu0 %v486
      %v727 = vpop.f32.mrb[0].mxu0
      %v728 = vadd.f32 %v656, %v727
      %v729 = vpop.f32.mrb[0].mxu0
      %730 = vdwg.mxu0
      %v731 = vxor.u32 %v728, 2147483648
      %v732 = vmul.f32 %v731, 1.442695
      %v733 = vpow.pop %v732
      %v734 = vadd.f32 %v733, 1.0
      %v735 = vrcp.pop %v734
      %v736 = vmul.f32 1.0, %v735
      %v737 = vmul.f32 %v567, %v649
      %v738 = vxor.u32 %v737, 2147483648
      %v739 = vmul.f32 %v738, 1.442695
      %v740 = vpow.pop %v739
      %v741 = vadd.f32 %v740, 1.0
      %v742 = vrcp.pop %v741
      %v743 = vmul.f32 1.0, %v742
      %v744 = vmul.f32 %v736, %v743
      %v745 = vadd.f32 %v744, 1.0
      %v746 = vlaneseq
      %v747 = vshrl.u32 %v746, 7
      %v748 = vsub.s32 0, %v747
      %v749 = vrot.slane %v745, %v748
      %751 = vbcast.lane.b32.xlu0 %v749, 256
      %v752 = vpop.permute.xlu0 %751
      %s754 = sor.u32 256, 8
      %755 = vbcast.lane.b32.xlu0 %v749, %s754
      %v756 = vpop.permute.xlu0 %755
      %v757 = vlaneseq
      %v758 = vshrl.u32 %v757, 7
      %v759 = vsub.s32 1, %v758
      %v760 = vrot.slane %v745, %v759
      %762 = vbcast.lane.b32.xlu0 %v760, 256
      %v763 = vpop.permute.xlu0 %762
      %s765 = sor.u32 256, 8
      %766 = vbcast.lane.b32.xlu0 %v760, %s765
      %v767 = vpop.permute.xlu0 %766
      %v768 = vmul.f32 %v341, %v752
      %v769 = vmul.f32 %v342, %v752
      %v770 = vmul.f32 %v343, %v756
      %v771 = vmul.f32 %v344, %v756
      %v772 = vmul.f32 %v345, %v763
      %v773 = vmul.f32 %v346, %v763
      %v774 = vmul.f32 %v347, %v767
      %v775 = vmul.f32 %v348, %v767
      %v776 = vmax.f32 %v768, 0.0
      %v777 = vmax.f32 %v769, 0.0
      %v778 = vmax.f32 %v770, 0.0
      %v779 = vmax.f32 %v771, 0.0
      %v780 = vmax.f32 %v772, 0.0
      %v781 = vmax.f32 %v773, 0.0
      %v782 = vmax.f32 %v774, 0.0
      %v783 = vmax.f32 %v775, 0.0
      %784 = vst [vmem:[%s339] sm:$0xff] %v776
      %785 = vst [vmem:[%s339 + $0x8] sm:$0xff] %v777
      %786 = vst [vmem:[%s339 + $0x10] sm:$0xff] %v778
      %787 = vst [vmem:[%s339 + $0x18] sm:$0xff] %v779
      %788 = vst [vmem:[%s339 + $0x20] sm:$0xff] %v780
      %789 = vst [vmem:[%s339 + $0x28] sm:$0xff] %v781
      %790 = vst [vmem:[%s339 + $0x30] sm:$0xff] %v782
      %791 = vst [vmem:[%s339 + $0x38] sm:$0xff] %v783
      %s792 = smul.u32 2, %s20
      %p793 = scmp.lt.s32.totalorder %s792, 3
      %s794 = scalar_select %p793, %s792, 3
      %s795 = smul.addr %s794, 4
      %s796 = smul.addr %s795, 8
      %s797 = scalar_lea.vmem %s9, %s796
      // Predicated region
      $region57: #{attention_forward.1} parent=55 // pred_check
        %p798 = pneg %p232
      $region58: #{attention_forward.1} parent=55 // pred_check_branch
        %800 = sbr.rel (%p798) target = $region60
      $region59: #{attention_forward.1} parent=55 // pred_region
        %s801 = smul.u32 2, %s20
      $region60: #{attention_forward.1} parent=55 // pred_fallthru
        _
    $region56: #{attention_forward.1} parent=5 // pred_fallthru
      _
    %p802 = scmp.le.s32.totalorder 2, %s15
    // Predicated region
    $region61: #{attention_forward.1} parent=5 // pred_check
      %p803 = pneg %p802
    $region62: #{attention_forward.1} parent=5 // pred_check_branch
      %805 = sbr.rel (%p803) target = $region64
    $region63: #{attention_forward.1} parent=5 // pred_region
      %s806 = ssub.s32 %s15, 2
      // Predicated region
      $region65: #{attention_forward.1} parent=63 // pred_check
        %p807 = pneg %p238
      $region66: #{attention_forward.1} parent=63 // pred_check_branch
        %809 = sbr.rel (%p807) target = $region68
      $region67: #{attention_forward.1} parent=63 // pred_region
        %s810 = smul.u32 2, %s21
        %p811 = scmp.lt.s32.totalorder %s810, 3
        %s812 = scalar_select %p811, %s810, 3
        %s813 = smul.addr %s812, 4
        %s814 = smul.addr %s813, 8
        %s815 = scalar_lea.vmem %s9, %s814
      $region68: #{attention_forward.1} parent=63 // pred_fallthru
        _
    $region64: #{attention_forward.1} parent=5 // pred_fallthru
      _
  $region6: #{attention_forward.1} parent=0 // loop_footer
    %s19 = sadd.s32 1, %s15
  $region7: #{attention_forward.1} parent=0 // loop_footer_branch
    %14 = sbr.rel target = $region3
  $region8: #{attention_forward.1} parent=0 // loop_exit
    _

</llo_original>
